<compile_context>
chip_gen: v7x
topology: tpu7x:2x2x1
jax: 0.10.0
libtpu: 0.0.40
codegen_flags: <defaults>
</compile_context>

<pallas_src>
import jax
import jax.numpy as jnp
from jax.experimental import pallas as pl
from jax.experimental.pallas import tpu as pltpu


def _depth2radius_kernel(x_ref, rate_ref, o_ref):
    # x_ref:    (T, L) lane-dense tile (L = G folded planes * w*w)
    # rate_ref: (1, L) VMEM-resident f32 rate row (same block every grid step)
    # o_ref:    (T, L) output tile
    # Multiply in f32 (VPU upcast), cast only on store.
    o_ref[...] = (x_ref[...].astype(jnp.float32) * rate_ref[...]).astype(o_ref.dtype)


def make_rate(w: int) -> jnp.ndarray:
    """Precompute the (w, w) float32 rate map, identical to the torch buffer."""
    f = w / 2.0
    yy, xx = jnp.meshgrid(jnp.arange(w), jnp.arange(w), indexing="ij")
    yc = yy.astype(jnp.float32) - (w - 1) / 2.0
    xc = xx.astype(jnp.float32) - (w - 1) / 2.0
    rate = jnp.sqrt(yc ** 2 + xc ** 2 + f ** 2) / f
    return rate.astype(jnp.float32)


def _vmem_capacity_bytes() -> int:
    """Physical VMEM of the local TPU; conservative fallback (v7x = 64 MiB)."""
    try:
        return int(pltpu.get_tpu_info().vmem_capacity_bytes)
    except Exception:
        return 64 << 20


def _sublane_align(dtype) -> int:
    """Native sublane packing: 8 for f32, 16 for bf16, 32 for int8/fp8."""
    return max(8, 32 // jnp.dtype(dtype).itemsize)


def _choose_lane_fold(n_planes: int, p: int, lane_target: int) -> int:
    """Largest divisor G of n_planes with G*p <= lane_target (lane folding)."""
    if p >= lane_target or n_planes <= 1:
        return 1
    g_max = min(n_planes, max(1, lane_target // p))
    best = 1
    for g in range(1, g_max + 1):
        if n_planes % g == 0:
            best = g
    return best


def _choose_rows_per_tile(n_rows: int, row_bytes: int, align: int,
                          tile_budget_bytes: int, min_grid: int = 2) -> int:
    """Rows per grid step: fit 4*T*row_bytes in budget, sublane-aligned,
    keeping >= min_grid grid steps when possible (v7x: 2 TCs/chip)."""
    t = max(1, tile_budget_bytes // max(1, 4 * row_bytes))
    t = min(t, n_rows)
    # Keep at least `min_grid` grid steps so both v7x TensorCores stream.
    if n_rows >= min_grid * align:
        t = min(t, -(-n_rows // min_grid))  # ceil(n_rows / min_grid)
    if t < n_rows:
        # Sublane alignment (multiple of `align`), or fall back to full extent.
        t = max(align, (t // align) * align)
        if t >= n_rows:
            return n_rows
        # Prefer a T that divides n_rows (only the trailing tile may be partial
        # otherwise); search a few aligned candidates downward.
        for cand in range(t, max(align, t // 2) - 1, -align):
            if n_rows % cand == 0:
                return cand
    return t


def depth2radius(x: jnp.ndarray, rate: jnp.ndarray, *,
                 lane_target: int = 2048,
                 force_pallas: bool = False) -> jnp.ndarray:
    """x: (B, C, w, w); rate: (w, w) -> (B, C, w, w), elementwise x * rate."""
    B, C, H, W = x.shape
    assert H == W and rate.shape[-2:] == (H, W)

    itemsize = jnp.dtype(x.dtype).itemsize

    # A lone broadcast-multiply is HBM-bound either way; for small standalone
    # workloads let XLA fuse it with neighbors instead of paying a custom call.
    if not force_pallas and (x.size * itemsize) < (4 << 20):
        return (x.astype(jnp.float32)
                * rate.reshape(1, 1, H, W).astype(jnp.float32)).astype(x.dtype)

    N = B * C                      # number of image planes
    P = H * W                      # elements per plane

    # Lane folding: fold G planes into the lane dim so the last dim is
    # ~lane_target wide (unmasked vst, fewer DMA descriptors).
    G = _choose_lane_fold(N, P, lane_target)
    R = N // G                     # rows after folding
    L = G * P                      # lane width after folding
    row_bytes = L * itemsize
    rate_bytes = L * 4             # rate kept in f32

    # Generation-aware VMEM budget: requirement (4*tile + rate + margin) kept
    # <= min(32 MiB, half of physical VMEM) -> ~8 MiB tiles on every gen,
    # safe inside v7x's 64 MiB physical VMEM.
    align = _sublane_align(x.dtype)
    vmem_cap = _vmem_capacity_bytes()
    margin = 2 << 20
    req_budget = min(32 << 20, max(8 << 20, vmem_cap // 2))
    tile_budget = max(4 * row_bytes, req_budget - 2 * rate_bytes - margin)

    T = _choose_rows_per_tile(R, row_bytes, align, tile_budget, min_grid=2)
    grid = (pl.cdiv(R, T),)

    # vmem_limit = actual requirement (never clamped below it).
    requirement = 4 * T * row_bytes + 2 * rate_bytes + margin
    vmem_limit = max(int(requirement), 16 << 20)

    x_flat = x.reshape(R, L)
    rate_row = jnp.tile(rate.reshape(1, P).astype(jnp.float32), (1, G))

    cost = pl.CostEstimate(
        flops=N * P,
        transcendentals=0,
        bytes_accessed=2 * N * P * itemsize + L * 4,
    )

    out_flat = pl.pallas_call(
        _depth2radius_kernel,
        out_shape=jax.ShapeDtypeStruct((R, L), x.dtype),
        grid_spec=pltpu.PrefetchScalarGridSpec(
            num_scalar_prefetch=0,
            grid=grid,
            in_specs=[
                # T folded rows per grid step, lane dim = L (full extent)
                pl.BlockSpec((T, L), lambda i: (i, 0)),
                # rate row: same block every step -> stays VMEM-resident
                pl.BlockSpec((1, L), lambda i: (0, 0)),
            ],
            out_specs=pl.BlockSpec((T, L), lambda i: (i, 0)),
        ),
        compiler_params=pltpu.CompilerParams(
            dimension_semantics=("parallel",),
            vmem_limit_bytes=vmem_limit,
        ),
        cost_estimate=cost,
    )(x_flat, rate_row)

    return out_flat.reshape(B, C, H, W)


if __name__ == "__main__":
    B, C, w = 2, 4, 16
    key = jax.random.PRNGKey(0)
    x = jax.random.normal(key, (B, C, w, w), dtype=jnp.float32)

    rate = make_rate(w)
    out = depth2radius(x, rate, force_pallas=True)
    out = jax.block_until_ready(out)

    # Reference check in plain JAX (same math as the torch forward).
    ref = x * rate[None, None, :, :]
    assert out.shape == (B, C, w, w)
    assert jnp.allclose(out, ref, atol=1e-6, rtol=1e-6)

    print("KERNEL_OK")
</pallas_src>

<mosaic_0001>
module attributes {stable_mosaic.version = 11 : i64} {
  func.func @_depth2radius_kernel(%arg0: i32, %arg1: memref<1x2048xf32, #tpu.memory_space<vmem>>, %arg2: memref<1x2048xf32, #tpu.memory_space<vmem>>, %arg3: memref<1x2048xf32, #tpu.memory_space<vmem>>) attributes {dimension_semantics = [#tpu.dimension_semantics<parallel>], iteration_bounds = array<i64: 1>, scalar_prefetch = 0 : i64, scratch_operands = 0 : i64, tpu.core_type = #tpu.core_type<tc>, window_params = [{transform_indices = @transform_0, window_bounds = array<i64: 1, 2048>}, {pipeline_mode = #tpu.pipeline_mode<synchronous>, transform_indices = @transform_1, window_bounds = array<i64: 1, 2048>}, {transform_indices = @transform_2, window_bounds = array<i64: 1, 2048>}]} {
    %c0 = arith.constant 0 : index
    %c0_0 = arith.constant 0 : index
    %0 = vector.load %arg1[%c0, %c0_0] : memref<1x2048xf32, #tpu.memory_space<vmem>>, vector<1x2048xf32>
    %c0_1 = arith.constant 0 : index
    %c0_2 = arith.constant 0 : index
    %1 = vector.load %arg2[%c0_1, %c0_2] : memref<1x2048xf32, #tpu.memory_space<vmem>>, vector<1x2048xf32>
    %2 = arith.mulf %0, %1 : vector<1x2048xf32>
    %c0_3 = arith.constant 0 : index
    %c0_4 = arith.constant 0 : index
    %3 = vector.load %arg3[%c0_3, %c0_4] : memref<1x2048xf32, #tpu.memory_space<vmem>>, vector<1x2048xf32>
    tpu.vector_store %arg3[%c0_3, %c0_4], %2 {strides = array<i32>} : memref<1x2048xf32, #tpu.memory_space<vmem>>, vector<1x2048xf32>,
    return
  }
  func.func @transform_0(%arg0: i32) -> (i32, i32) {
    %c0_i32 = arith.constant 0 : i32
    %c0_i32_0 = arith.constant 0 : i32
    return %arg0, %c0_i32 : i32, i32
  }
  func.func @transform_1(%arg0: i32) -> (i32, i32) {
    %c0_i32 = arith.constant 0 : i32
    %c0_i32_0 = arith.constant 0 : i32
    %c0_i32_1 = arith.constant 0 : i32
    return %c0_i32, %c0_i32_0 : i32, i32
  }
  func.func @transform_2(%arg0: i32) -> (i32, i32) {
    %c0_i32 = arith.constant 0 : i32
    %c0_i32_0 = arith.constant 0 : i32
    return %arg0, %c0_i32 : i32, i32
  }
}

</mosaic_0001>

<llo_original>
// kernel: tpu_custom_call.1
$region0: #{tpu_custom_call.1}
  #allocation0 [shape = 'u32[]', space=smem, size = 0x4, offset = 0x4, fixed_abs, tag = 'smem constant byte address 0x4 - core index']
  #allocation1 [shape = 'u32[144,128]{1,0:T(1,128)}', space=vmem, size = 0x12000, scoped, tag = 'internal scratch']
  %s0 = inlined_call_operand.hbm [shape: f32[1,2048], index: 0, kind: input, shape index: {}]
  %s1 = inlined_call_operand.hbm [shape: f32[1,2048], index: 1, kind: input, shape index: {}]
  %s2 = inlined_call_operand.hbm [shape: f32[1,2048], index: 2, kind: output, shape index: {}]
  %s3 = sld [smem:[#allocation0]]
  $region26: #{tpu_custom_call.1} parent=0
    _
  %s5 = ssub.s32 1, %s3
  %s6 = scalar_select 0, %s5, %s3
  $region1: #{tpu_custom_call.1} parent=0
    #allocation2 [shape = 'u8[8192]{0}', space=vmem, size = 0x2000, scoped, tag = 'input window, operand 0, single buffered']
    #allocation3 [shape = 's32[1]{0}', space=sflag, size = 0x4, scoped, tag = 'scoped memory for tpu_custom_call.1']
    #allocation4 [shape = 's32[1]{0}', space=sflag, size = 0x4, scoped, tag = 'scoped memory for tpu_custom_call.1']
    #allocation5 [shape = 'u8[8192]{0}', space=vmem, size = 0x2000, scoped, tag = 'input window, operand 1, single buffered']
    #allocation6 [shape = 's32[1]{0}', space=sflag, size = 0x4, scoped, tag = 'scoped memory for tpu_custom_call.1']
    #allocation7 [shape = 'u8[8192]{0}', space=vmem, size = 0x2000, scoped, tag = 'output window, operand 0, single buffered']
    %7 = vsyncpa [#allocation3], 0
    %8 = vsyncpa [#allocation6], 0
    %9 = vsyncpa [#allocation4], 0
    // Predicated region
    $region2: #{tpu_custom_call.1} parent=1 // pred_check
      _
    $region3: #{tpu_custom_call.1} parent=1 // pred_check_branch
      %11 = sbr.rel (0) target = $region5
    $region4: #{tpu_custom_call.1} parent=1 // pred_region
      %s13 = ssub.s32 256, 256
      %14 = vsyncadd [#allocation3], %s13
      %s16 = sshll.u32 [#allocation2], 4
      %s17 = int_to_ptr.vmem [resolvable:$true] %s16
      %19 = dma.hbm_to_vmem [thread:$0]  %s0, 256, %s17, [#allocation3]
    $region5: #{tpu_custom_call.1} parent=1 // pred_fallthru
      _
    // Predicated region
    $region6: #{tpu_custom_call.1} parent=1 // pred_check
      _
    $region7: #{tpu_custom_call.1} parent=1 // pred_check_branch
      %21 = sbr.rel (0) target = $region9
    $region8: #{tpu_custom_call.1} parent=1 // pred_region
      %s23 = ssub.s32 256, 256
      %24 = vsyncadd [#allocation6], %s23
      %s26 = sshll.u32 [#allocation5], 4
      %s27 = int_to_ptr.vmem [resolvable:$true] %s26
      %29 = dma.hbm_to_vmem [thread:$0]  %s1, 256, %s27, [#allocation6]
    $region9: #{tpu_custom_call.1} parent=1 // pred_fallthru
      _
    // Predicated region
    $region10: #{tpu_custom_call.1} parent=1 // pred_check
      _
    $region11: #{tpu_custom_call.1} parent=1 // pred_check_branch
      %31 = sbr.rel (0) target = $region13
    $region12: #{tpu_custom_call.1} parent=1 // pred_region
      %32 = dma.done [#allocation3], 256
    $region13: #{tpu_custom_call.1} parent=1 // pred_fallthru
      _
    // Predicated region
    $region14: #{tpu_custom_call.1} parent=1 // pred_check
      _
    $region15: #{tpu_custom_call.1} parent=1 // pred_check_branch
      %34 = sbr.rel (0) target = $region17
    $region16: #{tpu_custom_call.1} parent=1 // pred_region
      %35 = dma.done [#allocation6], 256
    $region17: #{tpu_custom_call.1} parent=1 // pred_fallthru
      _
    %v36 = vld [vmem:[#allocation2] sm:$0xff]
    %v37 = vld [vmem:[#allocation2 + $0x8] sm:$0xff]
    %v38 = vld [vmem:[#allocation5] sm:$0xff]
    %v39 = vld [vmem:[#allocation5 + $0x8] sm:$0xff]
    %v40 = vmul.f32 %v36, %v38
    %v41 = vmul.f32 %v37, %v39
    %42 = vst [vmem:[#allocation7] sm:$0xff] %v40
    %43 = vst [vmem:[#allocation7 + $0x8] sm:$0xff] %v41
    // Predicated region
    $region18: #{tpu_custom_call.1} parent=1 // pred_check
      _
    $region19: #{tpu_custom_call.1} parent=1 // pred_check_branch
      %45 = sbr.rel (0) target = $region21
    $region20: #{tpu_custom_call.1} parent=1 // pred_region
      %s47 = ssub.s32 256, 256
      %48 = vsyncadd [#allocation4], %s47
      %s50 = sshll.u32 [#allocation7], 4
      %s51 = int_to_ptr.vmem [resolvable:$true] %s50
      %53 = dma.vmem_to_hbm [thread:$0]  %s51, 256, %s2, [#allocation4]
    $region21: #{tpu_custom_call.1} parent=1 // pred_fallthru
      _
    // Predicated region
    $region22: #{tpu_custom_call.1} parent=1 // pred_check
      _
    $region23: #{tpu_custom_call.1} parent=1 // pred_check_branch
      %55 = sbr.rel (0) target = $region25
    $region24: #{tpu_custom_call.1} parent=1 // pred_region
      %56 = dma.done [#allocation4], 256
    $region25: #{tpu_custom_call.1} parent=1 // pred_fallthru
      _
    %57 = vsyncpa [#allocation3], 1
    %58 = vsyncpa [#allocation6], 1
    %59 = vsyncpa [#allocation4], 1

</llo_original>
